<compile_context>
chip_gen: v5e
topology: v5e:2x2
jax: 0.10.0
libtpu: 0.0.40
codegen_flags: <defaults>
</compile_context>

<pallas_src>
import jax
import jax.numpy as jnp
from jax.experimental import pallas as pl
from jax.experimental.pallas import tpu as pltpu


def convnet_kernel(x_ref, w1_ref, b1_ref, w2_ref, b2_ref, w3_ref, b3_ref, o_ref):
    # x_ref: (C_in, tile) bf16   w1_ref: (128, C_in) bf16   b1_ref: (128, 1) f32
    # w2_ref: (128, 128) bf16    b2_ref: (128, 1) f32
    # w3_ref: (128, 1) f32       b3_ref: (1,) f32 in SMEM   o_ref: (1, tile) f32

    # Stage 1: (128, C_in) @ (C_in, tile) -> (128, tile), bias + ReLU.
    h = jnp.dot(w1_ref[...], x_ref[...], preferred_element_type=jnp.float32)
    h = jnp.maximum(h + b1_ref[...], 0.0)

    # Stage 2: (128, 128) @ (128, tile) -> (128, tile), bias + ReLU (MXU-shaped).
    h = jnp.dot(w2_ref[...], h.astype(jnp.bfloat16),
                preferred_element_type=jnp.float32)
    h = jnp.maximum(h + b2_ref[...], 0.0)

    # Stage 3: 128 -> 1 projection on the VPU/XLU (broadcast-mul + sublane
    # reduce) instead of an N=1 matmul on the MXU, then bias + ReLU.
    y = jnp.sum(w3_ref[...] * h, axis=0, keepdims=True)       # (1, tile)
    o_ref[...] = jnp.maximum(y + b3_ref[0], 0.0)


def _round_up(v, m):
    return ((v + m - 1) // m) * m


def convnet_pallas(x_nchw, params, *, tile=4096):
    """x_nchw: (N, C_in, H, W) float32.  Returns (N, 1, H, W) float32."""
    w1, b1, w2, b2, w3, b3 = params
    N, C_in, H, W = x_nchw.shape
    HW = H * W

    # NCHW -> (N, C_in, H*W): pure reshape, no transpose (channels already lead
    # the spatial dims); pixels land on the lane axis.  Cast input to bf16.
    x_ncp = x_nchw.reshape(N, C_in, HW).astype(jnp.bfloat16)

    # Pixel tile: multiple of 128, capped so small inputs are not over-padded.
    # At tile=4096 the two live (128, tile) f32 intermediates are ~2 MiB each,
    # leaving ample headroom under v7x's 64 MiB VMEM while amortizing the
    # per-grid-step pipeline overhead.
    tile = max(128, min(_round_up(tile, 128), _round_up(HW, 128)))
    HW_pad = _round_up(HW, tile)
    if HW_pad != HW:
        # Padded pixels are computed and discarded (1x1 conv is per-pixel).
        x_ncp = jnp.pad(x_ncp, ((0, 0), (0, 0), (0, HW_pad - HW)))

    grid = (N, HW_pad // tile)

    flops = 2 * N * HW_pad * (C_in * 128 + 128 * 128 + 128)
    bytes_accessed = (
        N * C_in * HW_pad * 2          # x (bf16)
        + (w1.size + w2.size) * 2      # bf16 weights
        + (b1.size + b2.size + w3.size + b3.size) * 4
        + N * HW_pad * 4               # output (f32)
    )

    out = pl.pallas_call(
        convnet_kernel,
        out_shape=jax.ShapeDtypeStruct((N, 1, HW_pad), jnp.float32),
        grid_spec=pltpu.PrefetchScalarGridSpec(
            num_scalar_prefetch=0,
            grid=grid,
            in_specs=[
                pl.BlockSpec((None, C_in, tile), lambda n, i: (n, 0, i)),  # x tile
                pl.BlockSpec((128, C_in), lambda n, i: (0, 0)),            # w1
                pl.BlockSpec((128, 1), lambda n, i: (0, 0)),               # b1
                pl.BlockSpec((128, 128), lambda n, i: (0, 0)),             # w2
                pl.BlockSpec((128, 1), lambda n, i: (0, 0)),               # b2
                pl.BlockSpec((128, 1), lambda n, i: (0, 0)),               # w3
                pl.BlockSpec(memory_space=pltpu.MemorySpace.SMEM),         # b3
            ],
            out_specs=pl.BlockSpec((None, 1, tile), lambda n, i: (n, 0, i)),
        ),
        compiler_params=pltpu.CompilerParams(
            dimension_semantics=("parallel", "parallel"),
            vmem_limit_bytes=48 * 1024 * 1024,   # headroom, still < v7x 64 MiB
        ),
        cost_estimate=pl.CostEstimate(
            flops=flops, transcendentals=0, bytes_accessed=bytes_accessed),
    )(x_ncp, w1, b1, w2, b2, w3, b3)

    # (N, 1, HW_pad) -> drop padding -> (N, 1, H, W); pure reshape, no transpose.
    return out[:, :, :HW].reshape(N, 1, H, W)


def fold_bn(w, b, gamma, beta, mean, var, eps=1e-5):
    """Fold eval-mode BatchNorm into a (C_out, C_in) 1x1-conv weight + (C_out,) bias."""
    s = gamma / jnp.sqrt(var + eps)            # (C_out,)
    w_f = w * s[:, None]                       # scale output channels (rows)
    b_f = (b - mean) * s + beta
    return w_f, b_f


def make_params(key, c_in):
    """Deterministic synthetic parameters matching the PyTorch module's shapes.

    Weights stay in PyTorch's (C_out, C_in) orientation (1x1 spatial dims
    squeezed), which is exactly what the channels-on-sublanes kernel wants.
    """
    k1, k2, k3, k4, k5, k6 = jax.random.split(key, 6)
    eps = 1e-5

    def conv_init(kw, kb, fan_in, fan_out):
        bound = 1.0 / jnp.sqrt(fan_in)
        w = jax.random.uniform(kw, (fan_out, fan_in), jnp.float32, -bound, bound)
        b = jax.random.uniform(kb, (fan_out,), jnp.float32, -bound, bound)
        return w, b

    def bn_identity(c):
        return (jnp.ones((c,)), jnp.zeros((c,)), jnp.zeros((c,)), jnp.ones((c,)))

    # Block 1: Conv2d(c_in, 128, 1) + BN(128)
    w1, cb1 = conv_init(k1, k2, c_in, 128)
    g, be, m, v = bn_identity(128)
    w1, b1 = fold_bn(w1, cb1, g, be, m, v, eps)

    # Block mid: Conv2d(128, 128, 1) + BN(128)
    w2, cb2 = conv_init(k3, k4, 128, 128)
    g, be, m, v = bn_identity(128)
    w2, b2 = fold_bn(w2, cb2, g, be, m, v, eps)

    # Block 2: Conv2d(128, 1, 1) + BN(1)
    w3, cb3 = conv_init(k5, k6, 128, 1)
    g, be, m, v = bn_identity(1)
    w3, b3 = fold_bn(w3, cb3, g, be, m, v, eps)

    return (
        w1.astype(jnp.bfloat16),                    # (128, C_in) bf16
        b1.reshape(128, 1).astype(jnp.float32),     # (128, 1)
        w2.astype(jnp.bfloat16),                    # (128, 128) bf16
        b2.reshape(128, 1).astype(jnp.float32),     # (128, 1)
        w3.reshape(1, 128).T.astype(jnp.float32),   # (128, 1) f32 (reduce weights)
        b3.reshape(1).astype(jnp.float32),          # (1,) f32 (SMEM scalar)
    )


def convnet_ref(x_nchw, params):
    """Pure-JAX reference with the same (bf16-quantized) operands, f32 math."""
    w1, b1, w2, b2, w3, b3 = params
    N, C_in, H, W = x_nchw.shape
    x = x_nchw.reshape(N, C_in, H * W).astype(jnp.bfloat16).astype(jnp.float32)
    w1f = w1.astype(jnp.float32)
    w2f = w2.astype(jnp.float32)
    h = jnp.maximum(jnp.einsum('oc,ncp->nop', w1f, x) + b1[None], 0.0)
    h = jnp.maximum(jnp.einsum('oc,ncp->nop', w2f, h.astype(jnp.bfloat16).astype(jnp.float32)) + b2[None], 0.0)
    h = jnp.maximum(jnp.einsum('co,ncp->nop', w3, h) + b3.reshape(1, 1, 1), 0.0)
    return h.reshape(N, 1, H, W)


if __name__ == "__main__":
    key = jax.random.PRNGKey(0)
    kx, kp = jax.random.split(key)

    N, C_in, H, W = 2, 4, 16, 16          # small shapes; HW = 256 per image
    x = jax.random.normal(kx, (N, C_in, H, W), jnp.float32)
    params = make_params(kp, C_in)

    out = convnet_pallas(x, params, tile=4096)
    out = jax.block_until_ready(out)

    ref = convnet_ref(x, params)
    assert out.shape == (N, 1, H, W)
    # Same bf16 operands on both sides; only MXU vs XLA accumulation order differs.
    assert jnp.allclose(out, ref, atol=1e-3, rtol=1e-3)

    print("KERNEL_OK")
</pallas_src>

<mosaic_0001>
module attributes {stable_mosaic.version = 11 : i64} {
  func.func @convnet_kernel(%arg0: i32, %arg1: i32, %arg2: memref<1x4x256xbf16, #tpu.memory_space<vmem>>, %arg3: memref<128x4xbf16, #tpu.memory_space<vmem>>, %arg4: memref<128x1xf32, #tpu.memory_space<vmem>>, %arg5: memref<128x128xbf16, #tpu.memory_space<vmem>>, %arg6: memref<128x1xf32, #tpu.memory_space<vmem>>, %arg7: memref<128x1xf32, #tpu.memory_space<vmem>>, %arg8: memref<1xf32, #tpu.memory_space<smem>>, %arg9: memref<1x1x256xf32, #tpu.memory_space<vmem>>) attributes {dimension_semantics = [#tpu.dimension_semantics<parallel>, #tpu.dimension_semantics<parallel>], iteration_bounds = array<i64: 2, 1>, scalar_prefetch = 0 : i64, scratch_operands = 0 : i64, tpu.core_type = #tpu.core_type<tc>, window_params = [{transform_indices = @transform_0, window_bounds = array<i64: 1, 4, 256>}, {pipeline_mode = #tpu.pipeline_mode<synchronous>, transform_indices = @transform_1, window_bounds = array<i64: 128, 4>}, {pipeline_mode = #tpu.pipeline_mode<synchronous>, transform_indices = @transform_2, window_bounds = array<i64: 128, 1>}, {pipeline_mode = #tpu.pipeline_mode<synchronous>, transform_indices = @transform_3, window_bounds = array<i64: 128, 128>}, {pipeline_mode = #tpu.pipeline_mode<synchronous>, transform_indices = @transform_4, window_bounds = array<i64: 128, 1>}, {pipeline_mode = #tpu.pipeline_mode<synchronous>, transform_indices = @transform_5, window_bounds = array<i64: 128, 1>}, {transform_indices = @transform_6, window_bounds = array<i64: 1>}, {transform_indices = @transform_7, window_bounds = array<i64: 1, 1, 256>}]} {
    %c0 = arith.constant 0 : index
    %c0_0 = arith.constant 0 : index
    %0 = vector.load %arg3[%c0, %c0_0] : memref<128x4xbf16, #tpu.memory_space<vmem>>, vector<128x4xbf16>
    %c0_1 = arith.constant 0 : index
    %c0_2 = arith.constant 0 : index
    %c0_3 = arith.constant 0 : index
    %1 = vector.load %arg2[%c0_1, %c0_2, %c0_3] : memref<1x4x256xbf16, #tpu.memory_space<vmem>>, vector<1x4x256xbf16>
    %2 = vector.shape_cast %1 : vector<1x4x256xbf16> to vector<4x256xbf16>
    %cst = arith.constant dense<0.000000e+00> : vector<128x256xf32>
    %3 = tpu.matmul %0, %2, %cst {dimension_numbers = #tpu.dot_dimension_numbers<[1], [0], [0], [1], [0, 0, 1, 1], [], []>} : vector<128x4xbf16>, vector<4x256xbf16>, vector<128x256xf32> -> vector<128x256xf32>
    %c0_4 = arith.constant 0 : index
    %c0_5 = arith.constant 0 : index
    %4 = vector.load %arg4[%c0_4, %c0_5] : memref<128x1xf32, #tpu.memory_space<vmem>>, vector<128x1xf32>
    %5 = vector.broadcast %4 : vector<128x1xf32> to vector<128x256xf32>
    %6 = arith.addf %3, %5 : vector<128x256xf32>
    %cst_6 = arith.constant 0.000000e+00 : f32
    %7 = vector.broadcast %cst_6 : f32 to vector<128x256xf32>
    %8 = arith.maximumf %6, %7 : vector<128x256xf32>
    %c0_7 = arith.constant 0 : index
    %c0_8 = arith.constant 0 : index
    %9 = vector.load %arg5[%c0_7, %c0_8] : memref<128x128xbf16, #tpu.memory_space<vmem>>, vector<128x128xbf16>
    %10 = arith.truncf %8 : vector<128x256xf32> to vector<128x256xbf16>
    %cst_9 = arith.constant dense<0.000000e+00> : vector<128x256xf32>
    %11 = tpu.matmul %9, %10, %cst_9 {dimension_numbers = #tpu.dot_dimension_numbers<[1], [0], [0], [1], [0, 0, 1, 1], [], []>} : vector<128x128xbf16>, vector<128x256xbf16>, vector<128x256xf32> -> vector<128x256xf32>
    %c0_10 = arith.constant 0 : index
    %c0_11 = arith.constant 0 : index
    %12 = vector.load %arg6[%c0_10, %c0_11] : memref<128x1xf32, #tpu.memory_space<vmem>>, vector<128x1xf32>
    %13 = vector.broadcast %12 : vector<128x1xf32> to vector<128x256xf32>
    %14 = arith.addf %11, %13 : vector<128x256xf32>
    %cst_12 = arith.constant 0.000000e+00 : f32
    %15 = vector.broadcast %cst_12 : f32 to vector<128x256xf32>
    %16 = arith.maximumf %14, %15 : vector<128x256xf32>
    %c0_13 = arith.constant 0 : index
    %c0_14 = arith.constant 0 : index
    %17 = vector.load %arg7[%c0_13, %c0_14] : memref<128x1xf32, #tpu.memory_space<vmem>>, vector<128x1xf32>
    %18 = vector.broadcast %17 : vector<128x1xf32> to vector<128x256xf32>
    %19 = arith.mulf %18, %16 : vector<128x256xf32>
    %cst_15 = arith.constant dense<0.000000e+00> : vector<256xf32>
    %20 = vector.multi_reduction <add>, %19, %cst_15 [0] : vector<128x256xf32> to vector<256xf32>
    %21 = vector.shape_cast %20 : vector<256xf32> to vector<1x256xf32>
    %c0_16 = arith.constant 0 : index
    %22 = memref.load %arg8[%c0_16] : memref<1xf32, #tpu.memory_space<smem>>
    %23 = vector.broadcast %22 : f32 to vector<1x256xf32>
    %24 = arith.addf %21, %23 : vector<1x256xf32>
    %cst_17 = arith.constant 0.000000e+00 : f32
    %25 = vector.broadcast %cst_17 : f32 to vector<1x256xf32>
    %26 = arith.maximumf %24, %25 : vector<1x256xf32>
    %c0_18 = arith.constant 0 : index
    %c0_19 = arith.constant 0 : index
    %c0_20 = arith.constant 0 : index
    %27 = vector.load %arg9[%c0_18, %c0_19, %c0_20] : memref<1x1x256xf32, #tpu.memory_space<vmem>>, vector<1x1x256xf32>
    %28 = vector.shape_cast %27 : vector<1x1x256xf32> to vector<1x256xf32>
    %29 = vector.shape_cast %26 : vector<1x256xf32> to vector<1x1x256xf32>
    tpu.vector_store %arg9[%c0_18, %c0_19, %c0_20], %29 {strides = array<i32>} : memref<1x1x256xf32, #tpu.memory_space<vmem>>, vector<1x1x256xf32>,
    return
  }
  func.func @transform_0(%arg0: i32, %arg1: i32) -> (i32, i32, i32) {
    %c0_i32 = arith.constant 0 : i32
    %c0_i32_0 = arith.constant 0 : i32
    return %arg0, %c0_i32, %arg1 : i32, i32, i32
  }
  func.func @transform_1(%arg0: i32, %arg1: i32) -> (i32, i32) {
    %c0_i32 = arith.constant 0 : i32
    %c0_i32_0 = arith.constant 0 : i32
    %c0_i32_1 = arith.constant 0 : i32
    return %c0_i32, %c0_i32_0 : i32, i32
  }
  func.func @transform_2(%arg0: i32, %arg1: i32) -> (i32, i32) {
    %c0_i32 = arith.constant 0 : i32
    %c0_i32_0 = arith.constant 0 : i32
    %c0_i32_1 = arith.constant 0 : i32
    return %c0_i32, %c0_i32_0 : i32, i32
  }
  func.func @transform_3(%arg0: i32, %arg1: i32) -> (i32, i32) {
    %c0_i32 = arith.constant 0 : i32
    %c0_i32_0 = arith.constant 0 : i32
    %c0_i32_1 = arith.constant 0 : i32
    return %c0_i32, %c0_i32_0 : i32, i32
  }
  func.func @transform_4(%arg0: i32, %arg1: i32) -> (i32, i32) {
    %c0_i32 = arith.constant 0 : i32
    %c0_i32_0 = arith.constant 0 : i32
    %c0_i32_1 = arith.constant 0 : i32
    return %c0_i32, %c0_i32_0 : i32, i32
  }
  func.func @transform_5(%arg0: i32, %arg1: i32) -> (i32, i32) {
    %c0_i32 = arith.constant 0 : i32
    %c0_i32_0 = arith.constant 0 : i32
    %c0_i32_1 = arith.constant 0 : i32
    return %c0_i32, %c0_i32_0 : i32, i32
  }
  func.func @transform_6(%arg0: i32, %arg1: i32) -> i32 {
    %c0_i32 = arith.constant 0 : i32
    %c0_i32_0 = arith.constant 0 : i32
    return %c0_i32 : i32
  }
  func.func @transform_7(%arg0: i32, %arg1: i32) -> (i32, i32, i32) {
    %c0_i32 = arith.constant 0 : i32
    %c0_i32_0 = arith.constant 0 : i32
    return %arg0, %c0_i32, %arg1 : i32, i32, i32
  }
}

</mosaic_0001>

<llo_original>
// kernel: tpu_custom_call.1
$region0: #{tpu_custom_call.1}
  #allocation0 [shape = 'u32[]', space=smem, size = 0x4, offset = 0x4, fixed_abs, tag = 'smem constant byte address 0x4 - core index']
  #allocation1 [shape = 'u32[72,128]{1,0:T(1,128)}', space=vmem, size = 0x9000, scoped, tag = 'internal scratch']
  #allocation2 [shape = 'f32[1]{0:T(128)S(6)}', space=smem, size = 0x200, scoped, tag = 'scoped memory for tpu_custom_call.1']
  %s0 = inlined_call_operand.vmem [shape: bf16[2,4,256], index: 0, kind: input, shape index: {}]
  %s1 = inlined_call_operand.vmem [shape: bf16[128,4], index: 1, kind: input, shape index: {}]
  %s2 = inlined_call_operand.vmem [shape: f32[128,1], index: 2, kind: input, shape index: {}]
  %s3 = inlined_call_operand.vmem [shape: bf16[128,128], index: 3, kind: input, shape index: {}]
  %s4 = inlined_call_operand.vmem [shape: f32[128,1], index: 4, kind: input, shape index: {}]
  %s5 = inlined_call_operand.vmem [shape: f32[128,1], index: 5, kind: input, shape index: {}]
  %s6 = inlined_call_operand.<no memory space> [shape: f32[1], index: 6, kind: input, shape index: {}]
  %s7 = inlined_call_operand.hbm [shape: f32[2,1,256], index: 7, kind: output, shape index: {}]
  %s8 = sld [smem:[#allocation0]]
  $region61: #{tpu_custom_call.1} parent=0
    _
  %s10 = ssub.s32 1, %s8
  %s11 = scalar_select 0, %s10, %s8
  %12 = sst [smem:[#allocation2]] %s6
  $region1: #{tpu_custom_call.1} parent=0
    #allocation3 [shape = 'u8[2048]{0}', space=vmem, size = 0x800, scoped, tag = 'output window, operand 0']
    #allocation4 [shape = 's32[2]{0}', space=sflag, size = 0x8, scoped, tag = 'scoped memory for tpu_custom_call.1']
    %13 = vsyncpa [#allocation4], 0
    %s14 = scalar_lea.sflag [#allocation4], 1
    %15 = vsyncpa %s14, 0
    loop: start=0, step=1, limit=4
    $region2: #{tpu_custom_call.1} parent=1 // loop_pre_header
      _
    $region3: #{tpu_custom_call.1} parent=1 // loop_header
      %s17 = sphi 0, %s21
      %p18 = scmp.ge.s32.totalorder %s17, 4
      %s24 = sphi 0, %s36
      %s25 = sphi 0, %s32
      %s26 = sphi 0, %s24
      %s27 = sphi 0, %s25
      %s28 = sphi 0, %s26
      %s29 = sphi 0, %s27
      %s41 = sphi 0, %s43
      %s44 = sphi 0, %s41
      %s45 = sphi 0, %s44
      %s61 = sphi 0, %s45
      %s65 = sphi 0, %s65
      %s67 = sphi 0, %s65
      %s68 = sphi 0, %s67
      %s82 = sphi 0, %s68
      %s86 = sphi 0, %s86
      %s88 = sphi 0, %s86
      %s89 = sphi 0, %s88
      %s103 = sphi 0, %s89
      %s107 = sphi 0, %s107
      %s109 = sphi 0, %s107
      %s110 = sphi 0, %s109
      %s124 = sphi 0, %s110
      %s128 = sphi 0, %s128
      %s130 = sphi 0, %s128
      %s131 = sphi 0, %s130
      %s145 = sphi 0, %s131
      %s149 = sphi 0, %s149
      %s151 = sphi 0, %s149
      %s152 = sphi 0, %s151
      %s166 = sphi 0, %s152
      %s170 = sphi 0, %s170
      %s172 = sphi 0, %s170
      %s173 = sphi 0, %s172
      %s187 = sphi 0, %s173
      %s195 = sphi 0, %s197
      %s198 = sphi 0, %s195
      %s199 = sphi 0, %s198
      %s215 = sphi 0, %s199
    $region4: #{tpu_custom_call.1} parent=1 // loop_header_branch
      %20 = sbr.rel (%p18) target = $region8
    $region5: #{tpu_custom_call.1} parent=1 // loop_body
      %s22 = ssub.s32 %s17, 1
      %s23 = ssub.s32 %s17, 2
      %s30 = sadd.s32 1, %s25
      %p31 = scmp.ge.s32.totalorder %s30, 1
      %s32 = scalar_select %p31, 0, %s30
      %s33 = sadd.s32 1, %s24
      %s34 = scalar_select %p31, %s33, %s24
      %p35 = scmp.ge.s32.totalorder %s34, 2
      %s36 = scalar_select %p35, 0, %s34
      %s37 = ssub.s32 %s24, %s36
      %s38 = ssub.s32 %s25, %s32
      %s39 = sor.u32 %s37, %s38
      %p40 = scmp.eq.s32.totalorder %s39, 0
      %s42 = sadd.s32 %s41, 1
      %s43 = scalar_select %p40, %s41, %s42
      %p46 = pneg %p40
      %p47 = scmp.eq.s32.totalorder %s17, 1
      %p48 = por %p46, %p47
      %p49 = scmp.ne.s32.totalorder %s41, %s44
      %p50 = scmp.eq.s32.totalorder %s17, 0
      %p51 = por %p49, %p50
      %p52 = scmp.ne.s32.totalorder %s41, %s44
      %p53 = scmp.eq.s32.totalorder %s22, 1
      %p54 = por %p52, %p53
      %p55 = scmp.ne.s32.totalorder %s44, %s45
      %p56 = scmp.eq.s32.totalorder %s22, 0
      %p57 = por %p55, %p56
      %p58 = scmp.ne.s32.totalorder %s44, %s45
      %p59 = scmp.eq.s32.totalorder %s23, 1
      %p60 = por %p58, %p59
      %p62 = scmp.ne.s32.totalorder %s45, %s61
      %p63 = scmp.eq.s32.totalorder %s23, 0
      %p64 = por %p62, %p63
      %s66 = sadd.s32 %s65, 1
      %p69 = scmp.eq.s32.totalorder %s17, 1
      %p70 = scmp.ne.s32.totalorder %s65, %s67
      %p71 = scmp.eq.s32.totalorder %s17, 0
      %p72 = por %p70, %p71
      %p73 = scmp.ne.s32.totalorder %s65, %s67
      %p74 = scmp.eq.s32.totalorder %s22, 1
      %p75 = por %p73, %p74
      %p76 = scmp.ne.s32.totalorder %s67, %s68
      %p77 = scmp.eq.s32.totalorder %s22, 0
      %p78 = por %p76, %p77
      %p79 = scmp.ne.s32.totalorder %s67, %s68
      %p80 = scmp.eq.s32.totalorder %s23, 1
      %p81 = por %p79, %p80
      %p83 = scmp.ne.s32.totalorder %s68, %s82
      %p84 = scmp.eq.s32.totalorder %s23, 0
      %p85 = por %p83, %p84
      %s87 = sadd.s32 %s86, 1
      %p90 = scmp.eq.s32.totalorder %s17, 1
      %p91 = scmp.ne.s32.totalorder %s86, %s88
      %p92 = scmp.eq.s32.totalorder %s17, 0
      %p93 = por %p91, %p92
      %p94 = scmp.ne.s32.totalorder %s86, %s88
      %p95 = scmp.eq.s32.totalorder %s22, 1
      %p96 = por %p94, %p95
      %p97 = scmp.ne.s32.totalorder %s88, %s89
      %p98 = scmp.eq.s32.totalorder %s22, 0
      %p99 = por %p97, %p98
      %p100 = scmp.ne.s32.totalorder %s88, %s89
      %p101 = scmp.eq.s32.totalorder %s23, 1
      %p102 = por %p100, %p101
      %p104 = scmp.ne.s32.totalorder %s89, %s103
      %p105 = scmp.eq.s32.totalorder %s23, 0
      %p106 = por %p104, %p105
      %s108 = sadd.s32 %s107, 1
      %p111 = scmp.eq.s32.totalorder %s17, 1
      %p112 = scmp.ne.s32.totalorder %s107, %s109
      %p113 = scmp.eq.s32.totalorder %s17, 0
      %p114 = por %p112, %p113
      %p115 = scmp.ne.s32.totalorder %s107, %s109
      %p116 = scmp.eq.s32.totalorder %s22, 1
      %p117 = por %p115, %p116
      %p118 = scmp.ne.s32.totalorder %s109, %s110
      %p119 = scmp.eq.s32.totalorder %s22, 0
      %p120 = por %p118, %p119
      %p121 = scmp.ne.s32.totalorder %s109, %s110
      %p122 = scmp.eq.s32.totalorder %s23, 1
      %p123 = por %p121, %p122
      %p125 = scmp.ne.s32.totalorder %s110, %s124
      %p126 = scmp.eq.s32.totalorder %s23, 0
      %p127 = por %p125, %p126
      %s129 = sadd.s32 %s128, 1
      %p132 = scmp.eq.s32.totalorder %s17, 1
      %p133 = scmp.ne.s32.totalorder %s128, %s130
      %p134 = scmp.eq.s32.totalorder %s17, 0
      %p135 = por %p133, %p134
      %p136 = scmp.ne.s32.totalorder %s128, %s130
      %p137 = scmp.eq.s32.totalorder %s22, 1
      %p138 = por %p136, %p137
      %p139 = scmp.ne.s32.totalorder %s130, %s131
      %p140 = scmp.eq.s32.totalorder %s22, 0
      %p141 = por %p139, %p140
      %p142 = scmp.ne.s32.totalorder %s130, %s131
      %p143 = scmp.eq.s32.totalorder %s23, 1
      %p144 = por %p142, %p143
      %p146 = scmp.ne.s32.totalorder %s131, %s145
      %p147 = scmp.eq.s32.totalorder %s23, 0
      %p148 = por %p146, %p147
      %s150 = sadd.s32 %s149, 1
      %p153 = scmp.eq.s32.totalorder %s17, 1
      %p154 = scmp.ne.s32.totalorder %s149, %s151
      %p155 = scmp.eq.s32.totalorder %s17, 0
      %p156 = por %p154, %p155
      %p157 = scmp.ne.s32.totalorder %s149, %s151
      %p158 = scmp.eq.s32.totalorder %s22, 1
      %p159 = por %p157, %p158
      %p160 = scmp.ne.s32.totalorder %s151, %s152
      %p161 = scmp.eq.s32.totalorder %s22, 0
      %p162 = por %p160, %p161
      %p163 = scmp.ne.s32.totalorder %s151, %s152
      %p164 = scmp.eq.s32.totalorder %s23, 1
      %p165 = por %p163, %p164
      %p167 = scmp.ne.s32.totalorder %s152, %s166
      %p168 = scmp.eq.s32.totalorder %s23, 0
      %p169 = por %p167, %p168
      %s171 = sadd.s32 %s170, 1
      %p174 = scmp.eq.s32.totalorder %s17, 1
      %p175 = scmp.ne.s32.totalorder %s170, %s172
      %p176 = scmp.eq.s32.totalorder %s17, 0
      %p177 = por %p175, %p176
      %p178 = scmp.ne.s32.totalorder %s170, %s172
      %p179 = scmp.eq.s32.totalorder %s22, 1
      %p180 = por %p178, %p179
      %p181 = scmp.ne.s32.totalorder %s172, %s173
      %p182 = scmp.eq.s32.totalorder %s22, 0
      %p183 = por %p181, %p182
      %p184 = scmp.ne.s32.totalorder %s172, %s173
      %p185 = scmp.eq.s32.totalorder %s23, 1
      %p186 = por %p184, %p185
      %p188 = scmp.ne.s32.totalorder %s173, %s187
      %p189 = scmp.eq.s32.totalorder %s23, 0
      %p190 = por %p188, %p189
      %s191 = ssub.s32 %s24, %s36
      %s192 = ssub.s32 %s25, %s32
      %s193 = sor.u32 %s191, %s192
      %p194 = scmp.eq.s32.totalorder %s193, 0
      %s196 = sadd.s32 %s195, 1
      %s197 = scalar_select %p194, %s195, %s196
      %p200 = pneg %p194
      %p201 = scmp.eq.s32.totalorder %s17, 1
      %p202 = por %p200, %p201
      %p203 = scmp.ne.s32.totalorder %s195, %s198
      %p204 = scmp.eq.s32.totalorder %s17, 0
      %p205 = por %p203, %p204
      %p206 = scmp.ne.s32.totalorder %s195, %s198
      %p207 = scmp.eq.s32.totalorder %s22, 1
      %p208 = por %p206, %p207
      %p209 = scmp.ne.s32.totalorder %s198, %s199
      %p210 = scmp.eq.s32.totalorder %s22, 0
      %p211 = por %p209, %p210
      %p212 = scmp.ne.s32.totalorder %s198, %s199
      %p213 = scmp.eq.s32.totalorder %s23, 1
      %p214 = por %p212, %p213
      %p216 = scmp.ne.s32.totalorder %s199, %s215
      %p217 = scmp.eq.s32.totalorder %s23, 0
      %p218 = por %p216, %p217
      %p219 = scmp.le.s32.totalorder 1, %s17
      %p220 = scmp.lt.s32.totalorder %s17, 3
      %p221 = pnand %p219, %p220
      %p222 = pneg %p221
      // Predicated region
      $region9: #{tpu_custom_call.1} parent=5 // pred_check
        _
      $region10: #{tpu_custom_call.1} parent=5 // pred_check_branch
        %224 = sbr.rel (%p221) target = $region12
      $region11: #{tpu_custom_call.1} parent=5 // pred_region
        %s225 = ssub.s32 %s17, 1
        // Predicated region
        $region13: #{tpu_custom_call.1} parent=11 // pred_check
          %p226 = pneg %p78
        $region14: #{tpu_custom_call.1} parent=11 // pred_check_branch
          %228 = sbr.rel (%p226) target = $region16
        $region15: #{tpu_custom_call.1} parent=11 // pred_region
          _
        $region16: #{tpu_custom_call.1} parent=11 // pred_fallthru
          _
        // Predicated region
        $region17: #{tpu_custom_call.1} parent=11 // pred_check
          %p229 = pneg %p99
        $region18: #{tpu_custom_call.1} parent=11 // pred_check_branch
          %231 = sbr.rel (%p229) target = $region20
        $region19: #{tpu_custom_call.1} parent=11 // pred_region
          _
        $region20: #{tpu_custom_call.1} parent=11 // pred_fallthru
          _
        // Predicated region
        $region21: #{tpu_custom_call.1} parent=11 // pred_check
          %p232 = pneg %p120
        $region22: #{tpu_custom_call.1} parent=11 // pred_check_branch
          %234 = sbr.rel (%p232) target = $region24
        $region23: #{tpu_custom_call.1} parent=11 // pred_region
          _
        $region24: #{tpu_custom_call.1} parent=11 // pred_fallthru
          _
        // Predicated region
        $region25: #{tpu_custom_call.1} parent=11 // pred_check
          %p235 = pneg %p141
        $region26: #{tpu_custom_call.1} parent=11 // pred_check_branch
          %237 = sbr.rel (%p235) target = $region28
        $region27: #{tpu_custom_call.1} parent=11 // pred_region
          _
        $region28: #{tpu_custom_call.1} parent=11 // pred_fallthru
          _
        // Predicated region
        $region29: #{tpu_custom_call.1} parent=11 // pred_check
          %p238 = pneg %p162
        $region30: #{tpu_custom_call.1} parent=11 // pred_check_branch
          %240 = sbr.rel (%p238) target = $region32
        $region31: #{tpu_custom_call.1} parent=11 // pred_region
          _
        $region32: #{tpu_custom_call.1} parent=11 // pred_fallthru
          _
        // Predicated region
        $region33: #{tpu_custom_call.1} parent=11 // pred_check
          %p241 = pneg %p183
        $region34: #{tpu_custom_call.1} parent=11 // pred_check_branch
          %243 = sbr.rel (%p241) target = $region36
        $region35: #{tpu_custom_call.1} parent=11 // pred_region
          _
        $region36: #{tpu_custom_call.1} parent=11 // pred_fallthru
          _
      $region12: #{tpu_custom_call.1} parent=5 // pred_fallthru
        _
      %p244 = scmp.lt.s32.totalorder %s17, 2
      // Predicated region
      $region37: #{tpu_custom_call.1} parent=5 // pred_check
        %p245 = pneg %p244
      $region38: #{tpu_custom_call.1} parent=5 // pred_check_branch
        %247 = sbr.rel (%p245) target = $region40
      $region39: #{tpu_custom_call.1} parent=5 // pred_region
        // Predicated region
        $region41: #{tpu_custom_call.1} parent=39 // pred_check
          %p248 = pneg %p51
        $region42: #{tpu_custom_call.1} parent=39 // pred_check_branch
          %250 = sbr.rel (%p248) target = $region44
        $region43: #{tpu_custom_call.1} parent=39 // pred_region
          %s251 = smul.u32 2, %s25
          %p252 = scmp.lt.s32.totalorder %s24, 1
          %s253 = scalar_select %p252, %s24, 1
          %p254 = scmp.lt.s32.totalorder %s251, 1
          %s255 = scalar_select %p254, %s251, 1
          %s256 = smul.addr %s253, 2
          %s257 = sadd.s32 %s255, %s256
          %s258 = smul.addr %s257, 2
          %s259 = scalar_lea.vmem %s0, %s258
          %s260 = smul.u32 2, %s25
        $region44: #{tpu_custom_call.1} parent=39 // pred_fallthru
          _
      $region40: #{tpu_custom_call.1} parent=5 // pred_fallthru
        _
      %p261 = scmp.le.s32.totalorder 1, %s17
      %p262 = scmp.lt.s32.totalorder %s17, 3
      %p263 = pnand %p261, %p262
      %p264 = pneg %p263
      // Predicated region
      $region45: #{tpu_custom_call.1} parent=5 // pred_check
        _
      $region46: #{tpu_custom_call.1} parent=5 // pred_check_branch
        %266 = sbr.rel (%p263) target = $region48
      $region47: #{tpu_custom_call.1} parent=5 // pred_region
        %s267 = ssub.s32 %s17, 1
        %s268 = smul.u32 2, %s27
        %p269 = scmp.lt.s32.totalorder %s26, 1
        %s270 = scalar_select %p269, %s26, 1
        %p271 = scmp.lt.s32.totalorder %s268, 1
        %s272 = scalar_select %p271, %s268, 1
        %s273 = smul.addr %s270, 2
        %s274 = sadd.s32 %s272, %s273
        %s275 = smul.addr %s274, 2
        %s276 = scalar_lea.vmem %s0, %s275
        %p277 = pneg %p57
        %p278 = pneg %p54
        %p279 = pneg %p78
        %p280 = pneg %p75
        %p281 = pneg %p99
        %p282 = pneg %p96
        %p283 = pneg %p120
        %p284 = pneg %p117
        %p285 = pneg %p141
        %p286 = pneg %p138
        %p287 = pneg %p162
        %p288 = pneg %p159
        %p289 = pneg %p183
        %p290 = pneg %p180
        %p291 = pneg %p211
        %p292 = pneg %p208
        %s293 = sand.u32 %s198, 1
        %s294 = scalar_lea.sflag [#allocation4], %s293
        %s295 = sand.u32 %s198, 1
        %s296 = smul.addr %s295, 2
        %s297 = scalar_lea.vmem [#allocation3], %s296
        %s298 = smul.u32 2, %s27
        %p299 = scmp.lt.s32.totalorder %s26, 1
        %s300 = scalar_select %p299, %s26, 1
        %p301 = scmp.lt.s32.totalorder %s298, 1
        %s302 = scalar_select %p301, %s298, 1
        %s303 = smul.addr %s300, 2
        %s304 = sadd.s32 %s302, %s303
        %s305 = smul.addr %s304, 2
        %s306 = scalar_lea.vmem %s0, %s305
        %s307 = smul.u32 2, %s27
        %s308 = smul.u32 2, %s27
        %v310 = vld [vmem:[%s1] sm:$0xf]
        %v311 = vld [vmem:[%s1 + $0x4] sm:$0xf]
        %v312 = vld [vmem:[%s1 + $0x8] sm:$0xf]
        %v313 = vld [vmem:[%s1 + $0xc] sm:$0xf]
        %v314 = vld [vmem:[%s1 + $0x10] sm:$0xf]
        %v315 = vld [vmem:[%s1 + $0x14] sm:$0xf]
        %v316 = vld [vmem:[%s1 + $0x18] sm:$0xf]
        %v317 = vld [vmem:[%s1 + $0x1c] sm:$0xf]
        %v318 = vld [vmem:[%s1 + $0x20] sm:$0xf]
        %v319 = vld [vmem:[%s1 + $0x24] sm:$0xf]
        %v320 = vld [vmem:[%s1 + $0x28] sm:$0xf]
        %v321 = vld [vmem:[%s1 + $0x2c] sm:$0xf]
        %v322 = vld [vmem:[%s1 + $0x30] sm:$0xf]
        %v323 = vld [vmem:[%s1 + $0x34] sm:$0xf]
        %v324 = vld [vmem:[%s1 + $0x38] sm:$0xf]
        %v325 = vld [vmem:[%s1 + $0x3c] sm:$0xf]
        %v326 = vld [vmem:[%s306] sm:$0xf]
        %v327 = vld [vmem:[%s2] sm:$0xff]
        %v328 = vld [vmem:[%s2 + $0x8] sm:$0xff]
        %v329 = vld [vmem:[%s2 + $0x10] sm:$0xff]
        %v330 = vld [vmem:[%s2 + $0x18] sm:$0xff]
        %v331 = vld [vmem:[%s2 + $0x20] sm:$0xff]
        %v332 = vld [vmem:[%s2 + $0x28] sm:$0xff]
        %v333 = vld [vmem:[%s2 + $0x30] sm:$0xff]
        %v334 = vld [vmem:[%s2 + $0x38] sm:$0xff]
        %v335 = vld [vmem:[%s2 + $0x40] sm:$0xff]
        %v336 = vld [vmem:[%s2 + $0x48] sm:$0xff]
        %v337 = vld [vmem:[%s2 + $0x50] sm:$0xff]
        %v338 = vld [vmem:[%s2 + $0x58] sm:$0xff]
        %v339 = vld [vmem:[%s2 + $0x60] sm:$0xff]
        %v340 = vld [vmem:[%s2 + $0x68] sm:$0xff]
        %v341 = vld [vmem:[%s2 + $0x70] sm:$0xff]
        %v342 = vld [vmem:[%s2 + $0x78] sm:$0xff]
        %344 = vset.pattern.permute.xlu0 0
        %345 = vperm.xlu0 %344, %v327
        %v346 = vpop.permute.xlu0 %345
        %349 = vset.pattern.permute.xlu0 0
        %350 = vperm.xlu0 %349, %v328
        %v351 = vpop.permute.xlu0 %350
        %354 = vset.pattern.permute.xlu0 0
        %355 = vperm.xlu0 %354, %v329
        %v356 = vpop.permute.xlu0 %355
        %359 = vset.pattern.permute.xlu0 0
        %360 = vperm.xlu0 %359, %v330
        %v361 = vpop.permute.xlu0 %360
        %364 = vset.pattern.permute.xlu0 0
        %365 = vperm.xlu0 %364, %v331
        %v366 = vpop.permute.xlu0 %365
        %369 = vset.pattern.permute.xlu0 0
        %370 = vperm.xlu0 %369, %v332
        %v371 = vpop.permute.xlu0 %370
        %374 = vset.pattern.permute.xlu0 0
        %375 = vperm.xlu0 %374, %v333
        %v376 = vpop.permute.xlu0 %375
        %379 = vset.pattern.permute.xlu0 0
        %380 = vperm.xlu0 %379, %v334
        %v381 = vpop.permute.xlu0 %380
        %384 = vset.pattern.permute.xlu0 0
        %385 = vperm.xlu0 %384, %v335
        %v386 = vpop.permute.xlu0 %385
        %389 = vset.pattern.permute.xlu0 0
        %390 = vperm.xlu0 %389, %v336
        %v391 = vpop.permute.xlu0 %390
        %394 = vset.pattern.permute.xlu0 0
        %395 = vperm.xlu0 %394, %v337
        %v396 = vpop.permute.xlu0 %395
        %399 = vset.pattern.permute.xlu0 0
        %400 = vperm.xlu0 %399, %v338
        %v401 = vpop.permute.xlu0 %400
        %404 = vset.pattern.permute.xlu0 0
        %405 = vperm.xlu0 %404, %v339
        %v406 = vpop.permute.xlu0 %405
        %409 = vset.pattern.permute.xlu0 0
        %410 = vperm.xlu0 %409, %v340
        %v411 = vpop.permute.xlu0 %410
        %414 = vset.pattern.permute.xlu0 0
        %415 = vperm.xlu0 %414, %v341
        %v416 = vpop.permute.xlu0 %415
        %419 = vset.pattern.permute.xlu0 0
        %420 = vperm.xlu0 %419, %v342
        %v421 = vpop.permute.xlu0 %420
        %v439 = vunpack.c.l.b16 %v310
        %v440 = vunpack.c.l.b16 %v311
        %v441 = vunpack.c.l.b16 %v312
        %v442 = vunpack.c.l.b16 %v313
        %v443 = vunpack.c.l.b16 %v314
        %v444 = vunpack.c.l.b16 %v315
        %v445 = vunpack.c.l.b16 %v316
        %v446 = vunpack.c.l.b16 %v317
        %v447 = vunpack.c.l.b16 %v318
        %v448 = vunpack.c.l.b16 %v319
        %v449 = vunpack.c.l.b16 %v320
        %v450 = vunpack.c.l.b16 %v321
        %v451 = vunpack.c.l.b16 %v322
        %v452 = vunpack.c.l.b16 %v323
        %v453 = vunpack.c.l.b16 %v324
        %v454 = vunpack.c.l.b16 %v325
        %v455 = vpack.c.b16 %v440, %v439
        %v456 = vpack.c.b16 %v442, %v441
        %v457 = vpack.c.b16 %v444, %v443
        %v458 = vpack.c.b16 %v446, %v445
        %v459 = vpack.c.b16 %v448, %v447
        %v460 = vpack.c.b16 %v450, %v449
        %v461 = vpack.c.b16 %v452, %v451
        %v462 = vpack.c.b16 %v454, %v453
        %464 = vst [vmem:[#allocation1] ss:$4 sm:$0xff] %v326
        %v465 = vld.sshfl [vmem:[#allocation1] sm:$0xff pattern:$0x73625140]
        %v466 = vld.sshfl [vmem:[#allocation1 + $0x8] sm:$0xff pattern:$0x73625140]
        %vm467 = vcmask 31744
        %v469 = vsel %vm467, %v455, 0
        %v472 = vsel %vm467, %v456, 0
        %v475 = vsel %vm467, %v457, 0
        %v478 = vsel %vm467, %v458, 0
        %v481 = vsel %vm467, %v459, 0
        %v484 = vsel %vm467, %v460, 0
        %v487 = vsel %vm467, %v461, 0
        %v490 = vsel %vm467, %v462, 0
        %vm492 = vcmask 1041408
        %v493 = vsel %vm492, %v465, 0
        %v495 = vsel %vm492, %v466, 0
        %497 = vmatpush.bf16.msra.mxu0 0
        %498 = vmatpush.bf16.msra.mxu0 0
        %499 = vmatpush.bf16.msra.mxu0 0
        %500 = vmatpush.bf16.msra.mxu0 0
        %501 = vmatpush.bf16.msra.mxu0 0
        %502 = vmatpush.bf16.msra.mxu0 0
        %503 = vmatpush.bf16.msra.mxu0 0
        %504 = vmatpush.bf16.msra.mxu0 %v493
        %505 = vmatmul.bf16.gmra.mxu0 %v469
        %v506 = vpop.f32.mrf.mxu0
        %v507 = vadd.f32 %v346, %v506
        %v508 = vpop.f32.mrf.mxu0
        %v509 = vadd.f32 %v351, %v508
        %510 = vmatmul.bf16.gmra.mxu0 %v472
        %v511 = vpop.f32.mrf.mxu0
        %v512 = vadd.f32 %v356, %v511
        %v513 = vpop.f32.mrf.mxu0
        %v514 = vadd.f32 %v361, %v513
        %515 = vmatmul.bf16.gmra.mxu0 %v475
        %v516 = vpop.f32.mrf.mxu0
        %v517 = vadd.f32 %v366, %v516
        %v518 = vpop.f32.mrf.mxu0
        %v519 = vadd.f32 %v371, %v518
        %520 = vmatmul.bf16.gmra.mxu0 %v478
        %v521 = vpop.f32.mrf.mxu0
        %v522 = vadd.f32 %v376, %v521
        %v523 = vpop.f32.mrf.mxu0
        %v524 = vadd.f32 %v381, %v523
        %525 = vmatmul.bf16.gmra.mxu0 %v481
        %v526 = vpop.f32.mrf.mxu0
        %v527 = vadd.f32 %v386, %v526
        %v528 = vpop.f32.mrf.mxu0
        %v529 = vadd.f32 %v391, %v528
        %530 = vmatmul.bf16.gmra.mxu0 %v484
        %v531 = vpop.f32.mrf.mxu0
        %v532 = vadd.f32 %v396, %v531
        %v533 = vpop.f32.mrf.mxu0
        %v534 = vadd.f32 %v401, %v533
        %535 = vmatmul.bf16.gmra.mxu0 %v487
        %v536 = vpop.f32.mrf.mxu0
        %v537 = vadd.f32 %v406, %v536
        %v538 = vpop.f32.mrf.mxu0
        %v539 = vadd.f32 %v411, %v538
        %540 = vmatmul.bf16.gmra.mxu0 %v490
        %v541 = vpop.f32.mrf.mxu0
        %v542 = vadd.f32 %v416, %v541
        %v543 = vpop.f32.mrf.mxu0
        %v544 = vadd.f32 %v421, %v543
        %545 = vdwg.mxu0
        %546 = vmatpush.bf16.msra.mxu0 0
        %547 = vmatpush.bf16.msra.mxu0 0
        %548 = vmatpush.bf16.msra.mxu0 0
        %549 = vmatpush.bf16.msra.mxu0 0
        %550 = vmatpush.bf16.msra.mxu0 0
        %551 = vmatpush.bf16.msra.mxu0 0
        %552 = vmatpush.bf16.msra.mxu0 0
        %553 = vmatpush.bf16.msra.mxu0 %v495
        %554 = vmatmul.bf16.gmra.mxu0 %v469
        %v555 = vpop.f32.mrf.mxu0
        %v556 = vadd.f32 %v346, %v555
        %v557 = vpop.f32.mrf.mxu0
        %v558 = vadd.f32 %v351, %v557
        %559 = vmatmul.bf16.gmra.mxu0 %v472
        %v560 = vpop.f32.mrf.mxu0
        %v561 = vadd.f32 %v356, %v560
        %v562 = vpop.f32.mrf.mxu0
        %v563 = vadd.f32 %v361, %v562
        %564 = vmatmul.bf16.gmra.mxu0 %v475
        %v565 = vpop.f32.mrf.mxu0
        %v566 = vadd.f32 %v366, %v565
        %v567 = vpop.f32.mrf.mxu0
        %v568 = vadd.f32 %v371, %v567
        %569 = vmatmul.bf16.gmra.mxu0 %v478
        %v570 = vpop.f32.mrf.mxu0
        %v571 = vadd.f32 %v376, %v570
        %v572 = vpop.f32.mrf.mxu0
        %v573 = vadd.f32 %v381, %v572
        %574 = vmatmul.bf16.gmra.mxu0 %v481
        %v575 = vpop.f32.mrf.mxu0
        %v576 = vadd.f32 %v386, %v575
        %v577 = vpop.f32.mrf.mxu0
        %v578 = vadd.f32 %v391, %v577
        %579 = vmatmul.bf16.gmra.mxu0 %v484
        %v580 = vpop.f32.mrf.mxu0
        %v581 = vadd.f32 %v396, %v580
        %v582 = vpop.f32.mrf.mxu0
        %v583 = vadd.f32 %v401, %v582
        %584 = vmatmul.bf16.gmra.mxu0 %v487
        %v585 = vpop.f32.mrf.mxu0
        %v586 = vadd.f32 %v406, %v585
        %v587 = vpop.f32.mrf.mxu0
        %v588 = vadd.f32 %v411, %v587
        %589 = vmatmul.bf16.gmra.mxu0 %v490
        %v590 = vpop.f32.mrf.mxu0
        %v591 = vadd.f32 %v416, %v590
        %v592 = vpop.f32.mrf.mxu0
        %v593 = vadd.f32 %v421, %v592
        %594 = vdwg.mxu0
        %v595 = vmax.f32 %v507, 0.0
        %v596 = vmax.f32 %v556, 0.0
        %v597 = vmax.f32 %v509, 0.0
        %v598 = vmax.f32 %v558, 0.0
        %v599 = vmax.f32 %v512, 0.0
        %v600 = vmax.f32 %v561, 0.0
        %v601 = vmax.f32 %v514, 0.0
        %v602 = vmax.f32 %v563, 0.0
        %v603 = vmax.f32 %v517, 0.0
        %v604 = vmax.f32 %v566, 0.0
        %v605 = vmax.f32 %v519, 0.0
        %v606 = vmax.f32 %v568, 0.0
        %v607 = vmax.f32 %v522, 0.0
        %v608 = vmax.f32 %v571, 0.0
        %v609 = vmax.f32 %v524, 0.0
        %v610 = vmax.f32 %v573, 0.0
        %v611 = vmax.f32 %v527, 0.0
        %v612 = vmax.f32 %v576, 0.0
        %v613 = vmax.f32 %v529, 0.0
        %v614 = vmax.f32 %v578, 0.0
        %v615 = vmax.f32 %v532, 0.0
        %v616 = vmax.f32 %v581, 0.0
        %v617 = vmax.f32 %v534, 0.0
        %v618 = vmax.f32 %v583, 0.0
        %v619 = vmax.f32 %v537, 0.0
        %v620 = vmax.f32 %v586, 0.0
        %v621 = vmax.f32 %v539, 0.0
        %v622 = vmax.f32 %v588, 0.0
        %v623 = vmax.f32 %v542, 0.0
        %v624 = vmax.f32 %v591, 0.0
        %v625 = vmax.f32 %v544, 0.0
        %v626 = vmax.f32 %v593, 0.0
        %v627 = vld [vmem:[%s3] sm:$0xf]
        %v628 = vld [vmem:[%s3 + $0x4] sm:$0xf]
        %v629 = vld [vmem:[%s3 + $0x8] sm:$0xf]
        %v630 = vld [vmem:[%s3 + $0xc] sm:$0xf]
        %v631 = vld [vmem:[%s3 + $0x10] sm:$0xf]
        %v632 = vld [vmem:[%s3 + $0x14] sm:$0xf]
        %v633 = vld [vmem:[%s3 + $0x18] sm:$0xf]
        %v634 = vld [vmem:[%s3 + $0x1c] sm:$0xf]
        %v635 = vld [vmem:[%s3 + $0x20] sm:$0xf]
        %v636 = vld [vmem:[%s3 + $0x24] sm:$0xf]
        %v637 = vld [vmem:[%s3 + $0x28] sm:$0xf]
        %v638 = vld [vmem:[%s3 + $0x2c] sm:$0xf]
        %v639 = vld [vmem:[%s3 + $0x30] sm:$0xf]
        %v640 = vld [vmem:[%s3 + $0x34] sm:$0xf]
        %v641 = vld [vmem:[%s3 + $0x38] sm:$0xf]
        %v642 = vld [vmem:[%s3 + $0x3c] sm:$0xf]
        %v643 = vpack.c.bf16 %v597, %v595
        %v644 = vpack.c.bf16 %v598, %v596
        %v645 = vpack.c.bf16 %v601, %v599
        %v646 = vpack.c.bf16 %v602, %v600
        %v647 = vpack.c.bf16 %v605, %v603
        %v648 = vpack.c.bf16 %v606, %v604
        %v649 = vpack.c.bf16 %v609, %v607
        %v650 = vpack.c.bf16 %v610, %v608
        %v651 = vpack.c.bf16 %v613, %v611
        %v652 = vpack.c.bf16 %v614, %v612
        %v653 = vpack.c.bf16 %v617, %v615
        %v654 = vpack.c.bf16 %v618, %v616
        %v655 = vpack.c.bf16 %v621, %v619
        %v656 = vpack.c.bf16 %v622, %v620
        %v657 = vpack.c.bf16 %v625, %v623
        %v658 = vpack.c.bf16 %v626, %v624
        %v659 = vld [vmem:[%s4] sm:$0xff]
        %v660 = vld [vmem:[%s4 + $0x8] sm:$0xff]
        %v661 = vld [vmem:[%s4 + $0x10] sm:$0xff]
        %v662 = vld [vmem:[%s4 + $0x18] sm:$0xff]
        %v663 = vld [vmem:[%s4 + $0x20] sm:$0xff]
        %v664 = vld [vmem:[%s4 + $0x28] sm:$0xff]
        %v665 = vld [vmem:[%s4 + $0x30] sm:$0xff]
        %v666 = vld [vmem:[%s4 + $0x38] sm:$0xff]
        %v667 = vld [vmem:[%s4 + $0x40] sm:$0xff]
        %v668 = vld [vmem:[%s4 + $0x48] sm:$0xff]
        %v669 = vld [vmem:[%s4 + $0x50] sm:$0xff]
        %v670 = vld [vmem:[%s4 + $0x58] sm:$0xff]
        %v671 = vld [vmem:[%s4 + $0x60] sm:$0xff]
        %v672 = vld [vmem:[%s4 + $0x68] sm:$0xff]
        %v673 = vld [vmem:[%s4 + $0x70] sm:$0xff]
        %v674 = vld [vmem:[%s4 + $0x78] sm:$0xff]
        %676 = vset.pattern.permute.xlu0 0
        %677 = vperm.xlu0 %676, %v659
        %v678 = vpop.permute.xlu0 %677
        %681 = vset.pattern.permute.xlu0 0
        %682 = vperm.xlu0 %681, %v660
        %v683 = vpop.permute.xlu0 %682
        %686 = vset.pattern.permute.xlu0 0
        %687 = vperm.xlu0 %686, %v661
        %v688 = vpop.permute.xlu0 %687
        %691 = vset.pattern.permute.xlu0 0
        %692 = vperm.xlu0 %691, %v662
        %v693 = vpop.permute.xlu0 %692
        %696 = vset.pattern.permute.xlu0 0
        %697 = vperm.xlu0 %696, %v663
        %v698 = vpop.permute.xlu0 %697
        %701 = vset.pattern.permute.xlu0 0
        %702 = vperm.xlu0 %701, %v664
        %v703 = vpop.permute.xlu0 %702
        %706 = vset.pattern.permute.xlu0 0
        %707 = vperm.xlu0 %706, %v665
        %v708 = vpop.permute.xlu0 %707
        %711 = vset.pattern.permute.xlu0 0
        %712 = vperm.xlu0 %711, %v666
        %v713 = vpop.permute.xlu0 %712
        %716 = vset.pattern.permute.xlu0 0
        %717 = vperm.xlu0 %716, %v667
        %v718 = vpop.permute.xlu0 %717
        %721 = vset.pattern.permute.xlu0 0
        %722 = vperm.xlu0 %721, %v668
        %v723 = vpop.permute.xlu0 %722
        %726 = vset.pattern.permute.xlu0 0
        %727 = vperm.xlu0 %726, %v669
        %v728 = vpop.permute.xlu0 %727
        %731 = vset.pattern.permute.xlu0 0
        %732 = vperm.xlu0 %731, %v670
        %v733 = vpop.permute.xlu0 %732
        %736 = vset.pattern.permute.xlu0 0
        %737 = vperm.xlu0 %736, %v671
        %v738 = vpop.permute.xlu0 %737
        %741 = vset.pattern.permute.xlu0 0
        %742 = vperm.xlu0 %741, %v672
        %v743 = vpop.permute.xlu0 %742
        %746 = vset.pattern.permute.xlu0 0
        %747 = vperm.xlu0 %746, %v673
        %v748 = vpop.permute.xlu0 %747
        %751 = vset.pattern.permute.xlu0 0
        %752 = vperm.xlu0 %751, %v674
        %v753 = vpop.permute.xlu0 %752
        %v771 = vunpack.c.l.b16 %v627
        %v772 = vunpack.c.l.b16 %v628
        %v773 = vunpack.c.l.b16 %v629
        %v774 = vunpack.c.l.b16 %v630
        %v775 = vunpack.c.l.b16 %v631
        %v776 = vunpack.c.l.b16 %v632
        %v777 = vunpack.c.l.b16 %v633
        %v778 = vunpack.c.l.b16 %v634
        %v779 = vunpack.c.l.b16 %v635
        %v780 = vunpack.c.l.b16 %v636
        %v781 = vunpack.c.l.b16 %v637
        %v782 = vunpack.c.l.b16 %v638
        %v783 = vunpack.c.l.b16 %v639
        %v784 = vunpack.c.l.b16 %v640
        %v785 = vunpack.c.l.b16 %v641
        %v786 = vunpack.c.l.b16 %v642
        %v787 = vpack.c.b16 %v772, %v771
        %v788 = vpack.c.b16 %v774, %v773
        %v789 = vpack.c.b16 %v776, %v775
        %v790 = vpack.c.b16 %v778, %v777
        %v791 = vpack.c.b16 %v780, %v779
        %v792 = vpack.c.b16 %v782, %v781
        %v793 = vpack.c.b16 %v784, %v783
        %v794 = vpack.c.b16 %v786, %v785
        %803 = vmatpush.bf16.msra.mxu0 %v657
        %804 = vmatpush.bf16.msra.mxu0 %v655
        %805 = vmatpush.bf16.msra.mxu0 %v653
        %806 = vmatpush.bf16.msra.mxu0 %v651
        %807 = vmatpush.bf16.msra.mxu0 %v649
        %808 = vmatpush.bf16.msra.mxu0 %v647
        %809 = vmatpush.bf16.msra.mxu0 %v645
        %810 = vmatpush.bf16.msra.mxu0 %v643
        %811 = vmatmul.bf16.gmra.mxu0 %v787
        %v812 = vpop.f32.mrf.mxu0
        %v813 = vadd.f32 %v678, %v812
        %v814 = vpop.f32.mrf.mxu0
        %v815 = vadd.f32 %v683, %v814
        %816 = vmatmul.bf16.gmra.mxu0 %v788
        %v817 = vpop.f32.mrf.mxu0
        %v818 = vadd.f32 %v688, %v817
        %v819 = vpop.f32.mrf.mxu0
        %v820 = vadd.f32 %v693, %v819
        %821 = vmatmul.bf16.gmra.mxu0 %v789
        %v822 = vpop.f32.mrf.mxu0
        %v823 = vadd.f32 %v698, %v822
        %v824 = vpop.f32.mrf.mxu0
        %v825 = vadd.f32 %v703, %v824
        %826 = vmatmul.bf16.gmra.mxu0 %v790
        %v827 = vpop.f32.mrf.mxu0
        %v828 = vadd.f32 %v708, %v827
        %v829 = vpop.f32.mrf.mxu0
        %v830 = vadd.f32 %v713, %v829
        %831 = vmatmul.bf16.gmra.mxu0 %v791
        %v832 = vpop.f32.mrf.mxu0
        %v833 = vadd.f32 %v718, %v832
        %v834 = vpop.f32.mrf.mxu0
        %v835 = vadd.f32 %v723, %v834
        %836 = vmatmul.bf16.gmra.mxu0 %v792
        %v837 = vpop.f32.mrf.mxu0
        %v838 = vadd.f32 %v728, %v837
        %v839 = vpop.f32.mrf.mxu0
        %v840 = vadd.f32 %v733, %v839
        %841 = vmatmul.bf16.gmra.mxu0 %v793
        %v842 = vpop.f32.mrf.mxu0
        %v843 = vadd.f32 %v738, %v842
        %v844 = vpop.f32.mrf.mxu0
        %v845 = vadd.f32 %v743, %v844
        %846 = vmatmul.bf16.gmra.mxu0 %v794
        %v847 = vpop.f32.mrf.mxu0
        %v848 = vadd.f32 %v748, %v847
        %v849 = vpop.f32.mrf.mxu0
        %v850 = vadd.f32 %v753, %v849
        %851 = vdwg.mxu0
        %852 = vmatpush.bf16.msra.mxu0 %v658
        %853 = vmatpush.bf16.msra.mxu0 %v656
        %854 = vmatpush.bf16.msra.mxu0 %v654
        %855 = vmatpush.bf16.msra.mxu0 %v652
        %856 = vmatpush.bf16.msra.mxu0 %v650
        %857 = vmatpush.bf16.msra.mxu0 %v648
        %858 = vmatpush.bf16.msra.mxu0 %v646
        %859 = vmatpush.bf16.msra.mxu0 %v644
        %860 = vmatmul.bf16.gmra.mxu0 %v787
        %v861 = vpop.f32.mrf.mxu0
        %v862 = vadd.f32 %v678, %v861
        %v863 = vpop.f32.mrf.mxu0
        %v864 = vadd.f32 %v683, %v863
        %865 = vmatmul.bf16.gmra.mxu0 %v788
        %v866 = vpop.f32.mrf.mxu0
        %v867 = vadd.f32 %v688, %v866
        %v868 = vpop.f32.mrf.mxu0
        %v869 = vadd.f32 %v693, %v868
        %870 = vmatmul.bf16.gmra.mxu0 %v789
        %v871 = vpop.f32.mrf.mxu0
        %v872 = vadd.f32 %v698, %v871
        %v873 = vpop.f32.mrf.mxu0
        %v874 = vadd.f32 %v703, %v873
        %875 = vmatmul.bf16.gmra.mxu0 %v790
        %v876 = vpop.f32.mrf.mxu0
        %v877 = vadd.f32 %v708, %v876
        %v878 = vpop.f32.mrf.mxu0
        %v879 = vadd.f32 %v713, %v878
        %880 = vmatmul.bf16.gmra.mxu0 %v791
        %v881 = vpop.f32.mrf.mxu0
        %v882 = vadd.f32 %v718, %v881
        %v883 = vpop.f32.mrf.mxu0
        %v884 = vadd.f32 %v723, %v883
        %885 = vmatmul.bf16.gmra.mxu0 %v792
        %v886 = vpop.f32.mrf.mxu0
        %v887 = vadd.f32 %v728, %v886
        %v888 = vpop.f32.mrf.mxu0
        %v889 = vadd.f32 %v733, %v888
        %890 = vmatmul.bf16.gmra.mxu0 %v793
        %v891 = vpop.f32.mrf.mxu0
        %v892 = vadd.f32 %v738, %v891
        %v893 = vpop.f32.mrf.mxu0
        %v894 = vadd.f32 %v743, %v893
        %895 = vmatmul.bf16.gmra.mxu0 %v794
        %v896 = vpop.f32.mrf.mxu0
        %v897 = vadd.f32 %v748, %v896
        %v898 = vpop.f32.mrf.mxu0
        %v899 = vadd.f32 %v753, %v898
        %900 = vdwg.mxu0
        %v901 = vmax.f32 %v813, 0.0
        %v902 = vmax.f32 %v862, 0.0
        %v903 = vmax.f32 %v815, 0.0
        %v904 = vmax.f32 %v864, 0.0
        %v905 = vmax.f32 %v818, 0.0
        %v906 = vmax.f32 %v867, 0.0
        %v907 = vmax.f32 %v820, 0.0
        %v908 = vmax.f32 %v869, 0.0
        %v909 = vmax.f32 %v823, 0.0
        %v910 = vmax.f32 %v872, 0.0
        %v911 = vmax.f32 %v825, 0.0
        %v912 = vmax.f32 %v874, 0.0
        %v913 = vmax.f32 %v828, 0.0
        %v914 = vmax.f32 %v877, 0.0
        %v915 = vmax.f32 %v830, 0.0
        %v916 = vmax.f32 %v879, 0.0
        %v917 = vmax.f32 %v833, 0.0
        %v918 = vmax.f32 %v882, 0.0
        %v919 = vmax.f32 %v835, 0.0
        %v920 = vmax.f32 %v884, 0.0
        %v921 = vmax.f32 %v838, 0.0
        %v922 = vmax.f32 %v887, 0.0
        %v923 = vmax.f32 %v840, 0.0
        %v924 = vmax.f32 %v889, 0.0
        %v925 = vmax.f32 %v843, 0.0
        %v926 = vmax.f32 %v892, 0.0
        %v927 = vmax.f32 %v845, 0.0
        %v928 = vmax.f32 %v894, 0.0
        %v929 = vmax.f32 %v848, 0.0
        %v930 = vmax.f32 %v897, 0.0
        %v931 = vmax.f32 %v850, 0.0
        %v932 = vmax.f32 %v899, 0.0
        %v933 = vld [vmem:[%s5] sm:$0xff]
        %v934 = vld [vmem:[%s5 + $0x8] sm:$0xff]
        %v935 = vld [vmem:[%s5 + $0x10] sm:$0xff]
        %v936 = vld [vmem:[%s5 + $0x18] sm:$0xff]
        %v937 = vld [vmem:[%s5 + $0x20] sm:$0xff]
        %v938 = vld [vmem:[%s5 + $0x28] sm:$0xff]
        %v939 = vld [vmem:[%s5 + $0x30] sm:$0xff]
        %v940 = vld [vmem:[%s5 + $0x38] sm:$0xff]
        %v941 = vld [vmem:[%s5 + $0x40] sm:$0xff]
        %v942 = vld [vmem:[%s5 + $0x48] sm:$0xff]
        %v943 = vld [vmem:[%s5 + $0x50] sm:$0xff]
        %v944 = vld [vmem:[%s5 + $0x58] sm:$0xff]
        %v945 = vld [vmem:[%s5 + $0x60] sm:$0xff]
        %v946 = vld [vmem:[%s5 + $0x68] sm:$0xff]
        %v947 = vld [vmem:[%s5 + $0x70] sm:$0xff]
        %v948 = vld [vmem:[%s5 + $0x78] sm:$0xff]
        %950 = vset.pattern.permute.xlu0 0
        %951 = vperm.xlu0 %950, %v933
        %v952 = vpop.permute.xlu0 %951
        %955 = vset.pattern.permute.xlu0 0
        %956 = vperm.xlu0 %955, %v934
        %v957 = vpop.permute.xlu0 %956
        %960 = vset.pattern.permute.xlu0 0
        %961 = vperm.xlu0 %960, %v935
        %v962 = vpop.permute.xlu0 %961
        %965 = vset.pattern.permute.xlu0 0
        %966 = vperm.xlu0 %965, %v936
        %v967 = vpop.permute.xlu0 %966
        %970 = vset.pattern.permute.xlu0 0
        %971 = vperm.xlu0 %970, %v937
        %v972 = vpop.permute.xlu0 %971
        %975 = vset.pattern.permute.xlu0 0
        %976 = vperm.xlu0 %975, %v938
        %v977 = vpop.permute.xlu0 %976
        %980 = vset.pattern.permute.xlu0 0
        %981 = vperm.xlu0 %980, %v939
        %v982 = vpop.permute.xlu0 %981
        %985 = vset.pattern.permute.xlu0 0
        %986 = vperm.xlu0 %985, %v940
        %v987 = vpop.permute.xlu0 %986
        %990 = vset.pattern.permute.xlu0 0
        %991 = vperm.xlu0 %990, %v941
        %v992 = vpop.permute.xlu0 %991
        %995 = vset.pattern.permute.xlu0 0
        %996 = vperm.xlu0 %995, %v942
        %v997 = vpop.permute.xlu0 %996
        %1000 = vset.pattern.permute.xlu0 0
        %1001 = vperm.xlu0 %1000, %v943
        %v1002 = vpop.permute.xlu0 %1001
        %1005 = vset.pattern.permute.xlu0 0
        %1006 = vperm.xlu0 %1005, %v944
        %v1007 = vpop.permute.xlu0 %1006
        %1010 = vset.pattern.permute.xlu0 0
        %1011 = vperm.xlu0 %1010, %v945
        %v1012 = vpop.permute.xlu0 %1011
        %1015 = vset.pattern.permute.xlu0 0
        %1016 = vperm.xlu0 %1015, %v946
        %v1017 = vpop.permute.xlu0 %1016
        %1020 = vset.pattern.permute.xlu0 0
        %1021 = vperm.xlu0 %1020, %v947
        %v1022 = vpop.permute.xlu0 %1021
        %1025 = vset.pattern.permute.xlu0 0
        %1026 = vperm.xlu0 %1025, %v948
        %v1027 = vpop.permute.xlu0 %1026
        %v1029 = vmul.f32 %v952, %v901
        %v1030 = vmul.f32 %v952, %v902
        %v1031 = vmul.f32 %v957, %v903
        %v1032 = vmul.f32 %v957, %v904
        %v1033 = vmul.f32 %v962, %v905
        %v1034 = vmul.f32 %v962, %v906
        %v1035 = vmul.f32 %v967, %v907
        %v1036 = vmul.f32 %v967, %v908
        %v1037 = vmul.f32 %v972, %v909
        %v1038 = vmul.f32 %v972, %v910
        %v1039 = vmul.f32 %v977, %v911
        %v1040 = vmul.f32 %v977, %v912
        %v1041 = vmul.f32 %v982, %v913
        %v1042 = vmul.f32 %v982, %v914
        %v1043 = vmul.f32 %v987, %v915
        %v1044 = vmul.f32 %v987, %v916
        %v1045 = vmul.f32 %v992, %v917
        %v1046 = vmul.f32 %v992, %v918
        %v1047 = vmul.f32 %v997, %v919
        %v1048 = vmul.f32 %v997, %v920
        %v1049 = vmul.f32 %v1002, %v921
        %v1050 = vmul.f32 %v1002, %v922
        %v1051 = vmul.f32 %v1007, %v923
        %v1052 = vmul.f32 %v1007, %v924
        %v1053 = vmul.f32 %v1012, %v925
        %v1054 = vmul.f32 %v1012, %v926
        %v1055 = vmul.f32 %v1017, %v927
        %v1056 = vmul.f32 %v1017, %v928
        %v1057 = vmul.f32 %v1022, %v929
        %v1058 = vmul.f32 %v1022, %v930
        %v1059 = vmul.f32 %v1027, %v931
        %v1060 = vmul.f32 %v1027, %v932
        %v1061 = vadd.f32 %v1029, %v1031
        %v1062 = vadd.f32 %v1061, %v1033
        %v1063 = vadd.f32 %v1062, %v1035
        %v1064 = vadd.f32 %v1063, %v1037
        %v1065 = vadd.f32 %v1064, %v1039
        %v1066 = vadd.f32 %v1065, %v1041
        %v1067 = vadd.f32 %v1066, %v1043
        %v1068 = vadd.f32 %v1067, %v1045
        %v1069 = vadd.f32 %v1068, %v1047
        %v1070 = vadd.f32 %v1069, %v1049
        %v1071 = vadd.f32 %v1070, %v1051
        %v1072 = vadd.f32 %v1071, %v1053
        %v1073 = vadd.f32 %v1072, %v1055
        %v1074 = vadd.f32 %v1073, %v1057
        %v1075 = vadd.f32 %v1074, %v1059
        %v1076 = vrot.slane %v1075, 4
        %v1077 = vadd.f32 %v1075, %v1076
        %v1078 = vrot.slane %v1077, 2
        %v1079 = vadd.f32 %v1077, %v1078
        %v1080 = vrot.slane %v1079, 1
        %v1081 = vadd.f32 %v1079, %v1080
        %v1082 = vadd.f32 %v1030, %v1032
        %v1083 = vadd.f32 %v1082, %v1034
        %v1084 = vadd.f32 %v1083, %v1036
        %v1085 = vadd.f32 %v1084, %v1038
        %v1086 = vadd.f32 %v1085, %v1040
        %v1087 = vadd.f32 %v1086, %v1042
        %v1088 = vadd.f32 %v1087, %v1044
        %v1089 = vadd.f32 %v1088, %v1046
        %v1090 = vadd.f32 %v1089, %v1048
        %v1091 = vadd.f32 %v1090, %v1050
        %v1092 = vadd.f32 %v1091, %v1052
        %v1093 = vadd.f32 %v1092, %v1054
        %v1094 = vadd.f32 %v1093, %v1056
        %v1095 = vadd.f32 %v1094, %v1058
        %v1096 = vadd.f32 %v1095, %v1060
        %v1097 = vrot.slane %v1096, 4
        %v1098 = vadd.f32 %v1096, %v1097
        %v1099 = vrot.slane %v1098, 2
        %v1100 = vadd.f32 %v1098, %v1099
        %v1101 = vrot.slane %v1100, 1
        %v1102 = vadd.f32 %v1100, %v1101
        %s1103 = sld [smem:[#allocation2]]
        %v1104 = vstv %s1103
        %v1105 = vadd.f32 %v1081, %v1104
        %v1106 = vadd.f32 %v1102, %v1104
        %v1107 = vmax.f32 %v1105, 0.0
        %v1108 = vmax.f32 %v1106, 0.0
        %v1111 = vrot.slane %v1108, 7
        %vm1112 = vcmask 1040384
        %v1113 = vsel %vm1112, %v1107, %v1111
        %v1115 = vlaneseq
        %vm1116 = vcmp.ge.s32.totalorder %v1115, 0
        %vm1117 = vcmp.lt.s32.totalorder %v1115, 256
        %vm1118 = vmand %vm1116, %vm1117
        %1119 = vst.msk [vmem:[%s297] sm:$0x3] %vm1118, %v1113
        %s1120 = sand.u32 %s198, 1
        %s1121 = scalar_lea.sflag [#allocation4], %s1120
        %s1122 = sand.u32 %s198, 1
        %s1123 = smul.addr %s1122, 2
        %s1124 = scalar_lea.vmem [#allocation3], %s1123
        // Predicated region
        $region49: #{tpu_custom_call.1} parent=47 // pred_check
          %p1125 = pneg %p208
        $region50: #{tpu_custom_call.1} parent=47 // pred_check_branch
          %1127 = sbr.rel (%p1125) target = $region52
        $region51: #{tpu_custom_call.1} parent=47 // pred_region
          %s1128 = smul.u32 2, %s27
          %1130 = vsyncadd %s1121, 0
          %s1131 = smul.addr %s26, 2
          %s1132 = sadd.s32 %s1128, %s1131
          %s1133 = scalar_lea.hbm %s7, %s1132
          %s1135 = sshll.u32 %s1124, 4
          %s1136 = int_to_ptr.vmem [resolvable:$true] %s1135
          %s1137 = sshll.u32 %s1133, 4
          %s1138 = int_to_ptr.hbm [resolvable:$true] %s1137
          %1140 = dma.vmem_to_hbm [thread:$0]  %s1136, 32, %s1138, %s1121
        $region52: #{tpu_custom_call.1} parent=47 // pred_fallthru
          _
      $region48: #{tpu_custom_call.1} parent=5 // pred_fallthru
        _
      %p1141 = scmp.le.s32.totalorder 2, %s17
      // Predicated region
      $region53: #{tpu_custom_call.1} parent=5 // pred_check
        %p1142 = pneg %p1141
      $region54: #{tpu_custom_call.1} parent=5 // pred_check_branch
        %1144 = sbr.rel (%p1142) target = $region56
      $region55: #{tpu_custom_call.1} parent=5 // pred_region
        %s1145 = ssub.s32 %s17, 2
        // Predicated region
        $region57: #{tpu_custom_call.1} parent=55 // pred_check
          %p1146 = pneg %p214
        $region58: #{tpu_custom_call.1} parent=55 // pred_check_branch
          %1148 = sbr.rel (%p1146) target = $region60
        $region59: #{tpu_custom_call.1} parent=55 // pred_region
          %s1149 = sand.u32 %s199, 1
          %s1150 = scalar_lea.sflag [#allocation4], %s1149
          %s1151 = sand.u32 %s199, 1
          %s1152 = smul.addr %s1151, 2
          %s1153 = scalar_lea.vmem [#allocation3], %s1152
          %1155 = dma.done %s1150, 32
        $region60: #{tpu_custom_call.1} parent=55 // pred_fallthru
          _
      $region56: #{tpu_custom_call.1} parent=5 // pred_fallthru
        _
    $region6: #{tpu_custom_call.1} parent=1 // loop_footer
      %s21 = sadd.s32 1, %s17
    $region7: #{tpu_custom_call.1} parent=1 // loop_footer_branch
      %16 = sbr.rel target = $region3
    $region8: #{tpu_custom_call.1} parent=1 // loop_exit
      _
    %1156 = vsyncpa [#allocation4], 1
    %s1157 = scalar_lea.sflag [#allocation4], 1
    %1158 = vsyncpa %s1157, 1

</llo_original>
